<compile_context>
chip_gen: v5e
topology: v5e:2x2
jax: 0.10.0
libtpu: 0.0.40
codegen_flags: <defaults>
</compile_context>

<pallas_src>
import jax
import jax.numpy as jnp
from jax.experimental import pallas as pl
from jax.experimental.pallas import tpu as pltpu


def actor_kernel(xt_ref, w1_ref, b1_ref, w2_ref, b2_ref, o_ref):
    # xt_ref: [S, TB] bf16   w1_ref: [H, S] bf16   b1_ref: [H, 1] f32
    # w2_ref: [A, H] bf16    b2_ref: [A, 1] f32    o_ref:  [A, TB] f32
    # Layer 1 on the MXU (N dim = batch tile), f32 accumulation.
    h = jnp.dot(w1_ref[...], xt_ref[...], preferred_element_type=jnp.float32)
    h = h + b1_ref[...]                     # [H, TB] + [H, 1] broadcast
    # LeakyReLU (PyTorch default slope 0.01): single vmax on the VPU.
    h = jnp.maximum(h, 0.01 * h)
    # Layer 2 (A x H) @ (H x TB): bf16 operands, f32 accumulation.
    logits = jnp.dot(w2_ref[...], h.astype(w2_ref.dtype),
                     preferred_element_type=jnp.float32) + b2_ref[...]
    # Numerically-stable softmax over the action axis (axis 0 in this layout),
    # matching nn.Softmax(dim=1) on the original [B, A] orientation.
    m = jnp.max(logits, axis=0, keepdims=True)
    e = jnp.exp(logits - m)
    s = jnp.sum(e, axis=0, keepdims=True)
    o_ref[...] = (e * pl.reciprocal(s, approx=True)).astype(o_ref.dtype)


def actor_forward(x, params):
    """x: [B, state_dims] f32.
    params: (w1 [H,S] bf16, b1 [H,1] f32, w2 [A,H] bf16, b2 [A,1] f32)."""
    w1, b1, w2, b2 = params
    B, S = x.shape
    H = w1.shape[0]
    A = w2.shape[0]

    # Batch on the lane axis; cast the input once (halves x DMA, bf16 MXU path).
    xt = x.T.astype(w1.dtype)               # [S, B]

    # Grid selection: single step for small batches (per-step overhead dominates
    # this ~0.6 MFLOP problem); 512-wide lane tiles for large batches so each
    # step's compute amortizes the fixed pipeline cost and megacore can split it.
    if B >= 1024 and B % 512 == 0:
        tb = 512
    else:
        tb = B                              # full-extent block: always legal
    grid = (B // tb,)

    resident = lambda i: (0, 0)             # weights/biases stay VMEM-resident

    out_t = pl.pallas_call(
        actor_kernel,
        out_shape=jax.ShapeDtypeStruct((A, B), jnp.float32),
        grid=grid,
        in_specs=[
            pl.BlockSpec((S, tb), lambda i: (0, i)),   # x^T tile (lane = batch)
            pl.BlockSpec((H, S), resident),            # W1 (torch layout)
            pl.BlockSpec((H, 1), resident),            # b1
            pl.BlockSpec((A, H), resident),            # W2 (torch layout)
            pl.BlockSpec((A, 1), resident),            # b2
        ],
        out_specs=pl.BlockSpec((A, tb), lambda i: (0, i)),
        compiler_params=pltpu.CompilerParams(
            dimension_semantics=("parallel",),         # batch axis splits across cores
        ),
    )(xt, w1, b1, w2, b2)

    return out_t.T                           # [B, A]


def make_params(key, state_dims, num_actions, hidden_dim=64):
    """nn.Linear-shaped f32 params; kernel copy keeps torch layout, weights bf16."""
    kw1, kb1, kw2, kb2 = jax.random.split(key, 4)
    w1 = jax.random.normal(kw1, (hidden_dim, state_dims), dtype=jnp.float32) * 0.1
    b1 = jax.random.normal(kb1, (hidden_dim,), dtype=jnp.float32) * 0.1
    w2 = jax.random.normal(kw2, (num_actions, hidden_dim), dtype=jnp.float32) * 0.1
    b2 = jax.random.normal(kb2, (num_actions,), dtype=jnp.float32) * 0.1
    kernel_params = (
        w1.astype(jnp.bfloat16),             # [H, S] bf16 (MXU operand)
        b1.reshape(-1, 1),                   # [H, 1] f32
        w2.astype(jnp.bfloat16),             # [A, H] bf16 (MXU operand)
        b2.reshape(-1, 1),                   # [A, 1] f32
    )
    torch_like = (w1, b1, w2, b2)
    return kernel_params, torch_like


if __name__ == "__main__":
    state_dims = 32
    hidden_dim = 64
    num_actions = 4
    batch = 128                              # single grid step, lane-dense tile

    key = jax.random.PRNGKey(0)
    kx, kp = jax.random.split(key, 2)

    x = jax.random.normal(kx, (batch, state_dims), dtype=jnp.float32)
    kernel_params, (w1, b1, w2, b2) = make_params(kp, state_dims, num_actions, hidden_dim)

    out = actor_forward(x, kernel_params)
    out = jax.block_until_ready(out)

    # Reference 1: emulate the kernel's bf16 operand rounding (tight check).
    f32 = jnp.float32
    xb = x.astype(jnp.bfloat16).astype(f32)
    w1b = w1.astype(jnp.bfloat16).astype(f32)
    w2b = w2.astype(jnp.bfloat16).astype(f32)
    h_emul = xb @ w1b.T + b1
    h_emul = jnp.maximum(h_emul, 0.01 * h_emul)
    h_emul = h_emul.astype(jnp.bfloat16).astype(f32)
    logits_emul = h_emul @ w2b.T + b2
    ref_emul = jax.nn.softmax(logits_emul, axis=-1)

    # Reference 2: pure-f32 torch semantics (loose check; bf16 + approx recip drift).
    h_ref = x @ w1.T + b1
    h_ref = jnp.where(h_ref > 0, h_ref, 0.01 * h_ref)
    logits_ref = h_ref @ w2.T + b2
    ref = jax.nn.softmax(logits_ref, axis=-1)

    assert out.shape == (batch, num_actions)
    assert jnp.allclose(out, ref_emul, atol=5e-3, rtol=5e-3)
    assert jnp.allclose(out, ref, atol=3e-2, rtol=3e-2)
    assert jnp.allclose(jnp.sum(out, axis=-1), jnp.ones((batch,)), atol=1e-2)

    print("KERNEL_OK")
</pallas_src>

<mosaic_0001>
module attributes {stable_mosaic.version = 11 : i64} {
  func.func @actor_kernel(%arg0: i32, %arg1: memref<32x128xbf16, #tpu.memory_space<vmem>>, %arg2: memref<64x32xbf16, #tpu.memory_space<vmem>>, %arg3: memref<64x1xf32, #tpu.memory_space<vmem>>, %arg4: memref<4x64xbf16, #tpu.memory_space<vmem>>, %arg5: memref<4x1xf32, #tpu.memory_space<vmem>>, %arg6: memref<4x128xf32, #tpu.memory_space<vmem>>) attributes {dimension_semantics = [#tpu.dimension_semantics<parallel>], iteration_bounds = array<i64: 1>, scalar_prefetch = 0 : i64, scratch_operands = 0 : i64, tpu.core_type = #tpu.core_type<tc>, window_params = [{transform_indices = @transform_0, window_bounds = array<i64: 32, 128>}, {pipeline_mode = #tpu.pipeline_mode<synchronous>, transform_indices = @transform_1, window_bounds = array<i64: 64, 32>}, {pipeline_mode = #tpu.pipeline_mode<synchronous>, transform_indices = @transform_2, window_bounds = array<i64: 64, 1>}, {pipeline_mode = #tpu.pipeline_mode<synchronous>, transform_indices = @transform_3, window_bounds = array<i64: 4, 64>}, {pipeline_mode = #tpu.pipeline_mode<synchronous>, transform_indices = @transform_4, window_bounds = array<i64: 4, 1>}, {transform_indices = @transform_5, window_bounds = array<i64: 4, 128>}]} {
    %c0 = arith.constant 0 : index
    %c0_0 = arith.constant 0 : index
    %0 = vector.load %arg2[%c0, %c0_0] : memref<64x32xbf16, #tpu.memory_space<vmem>>, vector<64x32xbf16>
    %c0_1 = arith.constant 0 : index
    %c0_2 = arith.constant 0 : index
    %1 = vector.load %arg1[%c0_1, %c0_2] : memref<32x128xbf16, #tpu.memory_space<vmem>>, vector<32x128xbf16>
    %cst = arith.constant dense<0.000000e+00> : vector<64x128xf32>
    %2 = tpu.matmul %0, %1, %cst {dimension_numbers = #tpu.dot_dimension_numbers<[1], [0], [0], [1], [0, 0, 1, 1], [], []>} : vector<64x32xbf16>, vector<32x128xbf16>, vector<64x128xf32> -> vector<64x128xf32>
    %c0_3 = arith.constant 0 : index
    %c0_4 = arith.constant 0 : index
    %3 = vector.load %arg3[%c0_3, %c0_4] : memref<64x1xf32, #tpu.memory_space<vmem>>, vector<64x1xf32>
    %4 = vector.broadcast %3 : vector<64x1xf32> to vector<64x128xf32>
    %5 = arith.addf %2, %4 : vector<64x128xf32>
    %cst_5 = arith.constant 0.00999999977 : f32
    %6 = vector.broadcast %cst_5 : f32 to vector<64x128xf32>
    %7 = arith.mulf %6, %5 : vector<64x128xf32>
    %8 = arith.maximumf %5, %7 : vector<64x128xf32>
    %c0_6 = arith.constant 0 : index
    %c0_7 = arith.constant 0 : index
    %9 = vector.load %arg4[%c0_6, %c0_7] : memref<4x64xbf16, #tpu.memory_space<vmem>>, vector<4x64xbf16>
    %10 = arith.truncf %8 : vector<64x128xf32> to vector<64x128xbf16>
    %cst_8 = arith.constant dense<0.000000e+00> : vector<4x128xf32>
    %11 = tpu.matmul %9, %10, %cst_8 {dimension_numbers = #tpu.dot_dimension_numbers<[1], [0], [0], [1], [0, 0, 1, 1], [], []>} : vector<4x64xbf16>, vector<64x128xbf16>, vector<4x128xf32> -> vector<4x128xf32>
    %c0_9 = arith.constant 0 : index
    %c0_10 = arith.constant 0 : index
    %12 = vector.load %arg5[%c0_9, %c0_10] : memref<4x1xf32, #tpu.memory_space<vmem>>, vector<4x1xf32>
    %13 = vector.broadcast %12 : vector<4x1xf32> to vector<4x128xf32>
    %14 = arith.addf %11, %13 : vector<4x128xf32>
    %cst_11 = arith.constant dense<0xFF800000> : vector<128xf32>
    %15 = vector.multi_reduction <maximumf>, %14, %cst_11 [0] : vector<4x128xf32> to vector<128xf32>
    %16 = vector.shape_cast %15 : vector<128xf32> to vector<1x128xf32>
    %17 = vector.broadcast %16 : vector<1x128xf32> to vector<4x128xf32>
    %18 = arith.subf %14, %17 : vector<4x128xf32>
    %19 = math.exp %18 : vector<4x128xf32>
    %cst_12 = arith.constant dense<0.000000e+00> : vector<128xf32>
    %20 = vector.multi_reduction <add>, %19, %cst_12 [0] : vector<4x128xf32> to vector<128xf32>
    %21 = vector.shape_cast %20 : vector<128xf32> to vector<1x128xf32>
    %22 = tpu.reciprocal %21 {approx = true} : vector<1x128xf32> -> vector<1x128xf32>
    %23 = vector.broadcast %22 : vector<1x128xf32> to vector<4x128xf32>
    %24 = arith.mulf %19, %23 : vector<4x128xf32>
    %c0_13 = arith.constant 0 : index
    %c0_14 = arith.constant 0 : index
    %25 = vector.load %arg6[%c0_13, %c0_14] : memref<4x128xf32, #tpu.memory_space<vmem>>, vector<4x128xf32>
    tpu.vector_store %arg6[%c0_13, %c0_14], %24 {strides = array<i32>} : memref<4x128xf32, #tpu.memory_space<vmem>>, vector<4x128xf32>,
    return
  }
  func.func @transform_0(%arg0: i32) -> (i32, i32) {
    %c0_i32 = arith.constant 0 : i32
    %c0_i32_0 = arith.constant 0 : i32
    return %c0_i32, %arg0 : i32, i32
  }
  func.func @transform_1(%arg0: i32) -> (i32, i32) {
    %c0_i32 = arith.constant 0 : i32
    %c0_i32_0 = arith.constant 0 : i32
    %c0_i32_1 = arith.constant 0 : i32
    return %c0_i32, %c0_i32_0 : i32, i32
  }
  func.func @transform_2(%arg0: i32) -> (i32, i32) {
    %c0_i32 = arith.constant 0 : i32
    %c0_i32_0 = arith.constant 0 : i32
    %c0_i32_1 = arith.constant 0 : i32
    return %c0_i32, %c0_i32_0 : i32, i32
  }
  func.func @transform_3(%arg0: i32) -> (i32, i32) {
    %c0_i32 = arith.constant 0 : i32
    %c0_i32_0 = arith.constant 0 : i32
    %c0_i32_1 = arith.constant 0 : i32
    return %c0_i32, %c0_i32_0 : i32, i32
  }
  func.func @transform_4(%arg0: i32) -> (i32, i32) {
    %c0_i32 = arith.constant 0 : i32
    %c0_i32_0 = arith.constant 0 : i32
    %c0_i32_1 = arith.constant 0 : i32
    return %c0_i32, %c0_i32_0 : i32, i32
  }
  func.func @transform_5(%arg0: i32) -> (i32, i32) {
    %c0_i32 = arith.constant 0 : i32
    %c0_i32_0 = arith.constant 0 : i32
    return %c0_i32, %arg0 : i32, i32
  }
}

</mosaic_0001>

<llo_original>
// kernel: tpu_custom_call.1
$region0: #{tpu_custom_call.1}
  #allocation0 [shape = 'u32[]', space=smem, size = 0x4, offset = 0x4, fixed_abs, tag = 'smem constant byte address 0x4 - core index']
  #allocation1 [shape = 'u32[72,128]{1,0:T(1,128)}', space=vmem, size = 0x9000, scoped, tag = 'internal scratch']
  %s0 = inlined_call_operand.vmem [shape: bf16[32,128], index: 0, kind: input, shape index: {}]
  %s1 = inlined_call_operand.vmem [shape: bf16[64,32], index: 1, kind: input, shape index: {}]
  %s2 = inlined_call_operand.vmem [shape: f32[64,1], index: 2, kind: input, shape index: {}]
  %s3 = inlined_call_operand.vmem [shape: bf16[4,64], index: 3, kind: input, shape index: {}]
  %s4 = inlined_call_operand.vmem [shape: f32[4,1], index: 4, kind: input, shape index: {}]
  %s5 = inlined_call_operand.hbm [shape: f32[4,128], index: 5, kind: output, shape index: {}]
  %s6 = sld [smem:[#allocation0]]
  $region30: #{tpu_custom_call.1} parent=0
    _
  %s8 = ssub.s32 1, %s6
  %s9 = scalar_select 0, %s8, %s6
  $region1: #{tpu_custom_call.1} parent=0
    #allocation2 [shape = 'u8[2048]{0}', space=vmem, size = 0x800, scoped, tag = 'output window, operand 0, single buffered']
    #allocation3 [shape = 's32[1]{0}', space=sflag, size = 0x4, scoped, tag = 'scoped memory for tpu_custom_call.1']
    %10 = vsyncpa [#allocation3], 0
    // Predicated region
    $region2: #{tpu_custom_call.1} parent=1 // pred_check
      _
    $region3: #{tpu_custom_call.1} parent=1 // pred_check_branch
      %12 = sbr.rel (0) target = $region5
    $region4: #{tpu_custom_call.1} parent=1 // pred_region
      _
    $region5: #{tpu_custom_call.1} parent=1 // pred_fallthru
      _
    // Predicated region
    $region6: #{tpu_custom_call.1} parent=1 // pred_check
      _
    $region7: #{tpu_custom_call.1} parent=1 // pred_check_branch
      %14 = sbr.rel (0) target = $region9
    $region8: #{tpu_custom_call.1} parent=1 // pred_region
      _
    $region9: #{tpu_custom_call.1} parent=1 // pred_fallthru
      _
    // Predicated region
    $region10: #{tpu_custom_call.1} parent=1 // pred_check
      _
    $region11: #{tpu_custom_call.1} parent=1 // pred_check_branch
      %16 = sbr.rel (0) target = $region13
    $region12: #{tpu_custom_call.1} parent=1 // pred_region
      _
    $region13: #{tpu_custom_call.1} parent=1 // pred_fallthru
      _
    // Predicated region
    $region14: #{tpu_custom_call.1} parent=1 // pred_check
      _
    $region15: #{tpu_custom_call.1} parent=1 // pred_check_branch
      %18 = sbr.rel (0) target = $region17
    $region16: #{tpu_custom_call.1} parent=1 // pred_region
      _
    $region17: #{tpu_custom_call.1} parent=1 // pred_fallthru
      _
    // Predicated region
    $region18: #{tpu_custom_call.1} parent=1 // pred_check
      _
    $region19: #{tpu_custom_call.1} parent=1 // pred_check_branch
      %20 = sbr.rel (0) target = $region21
    $region20: #{tpu_custom_call.1} parent=1 // pred_region
      _
    $region21: #{tpu_custom_call.1} parent=1 // pred_fallthru
      _
    %v22 = vld [vmem:[%s1] sm:$0xf]
    %v23 = vld [vmem:[%s1 + $0x4] sm:$0xf]
    %v24 = vld [vmem:[%s1 + $0x8] sm:$0xf]
    %v25 = vld [vmem:[%s1 + $0xc] sm:$0xf]
    %v26 = vld [vmem:[%s1 + $0x10] sm:$0xf]
    %v27 = vld [vmem:[%s1 + $0x14] sm:$0xf]
    %v28 = vld [vmem:[%s1 + $0x18] sm:$0xf]
    %v29 = vld [vmem:[%s1 + $0x1c] sm:$0xf]
    %v30 = vld [vmem:[%s0] sm:$0xf]
    %v31 = vld [vmem:[%s0 + $0x4] sm:$0xf]
    %v32 = vld [vmem:[%s0 + $0x8] sm:$0xf]
    %v33 = vld [vmem:[%s0 + $0xc] sm:$0xf]
    %v34 = vld [vmem:[%s2] sm:$0xff]
    %v35 = vld [vmem:[%s2 + $0x8] sm:$0xff]
    %v36 = vld [vmem:[%s2 + $0x10] sm:$0xff]
    %v37 = vld [vmem:[%s2 + $0x18] sm:$0xff]
    %v38 = vld [vmem:[%s2 + $0x20] sm:$0xff]
    %v39 = vld [vmem:[%s2 + $0x28] sm:$0xff]
    %v40 = vld [vmem:[%s2 + $0x30] sm:$0xff]
    %v41 = vld [vmem:[%s2 + $0x38] sm:$0xff]
    %43 = vset.pattern.permute.xlu0 0
    %44 = vperm.xlu0 %43, %v34
    %v45 = vpop.permute.xlu0 %44
    %48 = vset.pattern.permute.xlu0 0
    %49 = vperm.xlu0 %48, %v35
    %v50 = vpop.permute.xlu0 %49
    %53 = vset.pattern.permute.xlu0 0
    %54 = vperm.xlu0 %53, %v36
    %v55 = vpop.permute.xlu0 %54
    %58 = vset.pattern.permute.xlu0 0
    %59 = vperm.xlu0 %58, %v37
    %v60 = vpop.permute.xlu0 %59
    %63 = vset.pattern.permute.xlu0 0
    %64 = vperm.xlu0 %63, %v38
    %v65 = vpop.permute.xlu0 %64
    %68 = vset.pattern.permute.xlu0 0
    %69 = vperm.xlu0 %68, %v39
    %v70 = vpop.permute.xlu0 %69
    %73 = vset.pattern.permute.xlu0 0
    %74 = vperm.xlu0 %73, %v40
    %v75 = vpop.permute.xlu0 %74
    %78 = vset.pattern.permute.xlu0 0
    %79 = vperm.xlu0 %78, %v41
    %v80 = vpop.permute.xlu0 %79
    %v90 = vunpack.c.l.b16 %v22
    %v91 = vunpack.c.l.b16 %v23
    %v92 = vunpack.c.l.b16 %v24
    %v93 = vunpack.c.l.b16 %v25
    %v94 = vunpack.c.l.b16 %v26
    %v95 = vunpack.c.l.b16 %v27
    %v96 = vunpack.c.l.b16 %v28
    %v97 = vunpack.c.l.b16 %v29
    %v98 = vpack.c.b16 %v91, %v90
    %v99 = vpack.c.b16 %v93, %v92
    %v100 = vpack.c.b16 %v95, %v94
    %v101 = vpack.c.b16 %v97, %v96
    %v106 = vunpack.c.l.b16 %v30
    %v107 = vunpack.c.l.b16 %v31
    %v108 = vunpack.c.l.b16 %v32
    %v109 = vunpack.c.l.b16 %v33
    %v110 = vpack.c.b16 %v107, %v106
    %v111 = vpack.c.b16 %v109, %v108
    %vm114 = vcmask 261120
    %v116 = vsel %vm114, %v98, 0
    %v119 = vsel %vm114, %v99, 0
    %v122 = vsel %vm114, %v100, 0
    %v125 = vsel %vm114, %v101, 0
    %127 = vmatpush.bf16.msra.mxu0 0
    %128 = vmatpush.bf16.msra.mxu0 0
    %129 = vmatpush.bf16.msra.mxu0 0
    %130 = vmatpush.bf16.msra.mxu0 0
    %131 = vmatpush.bf16.msra.mxu0 0
    %132 = vmatpush.bf16.msra.mxu0 0
    %133 = vmatpush.bf16.msra.mxu0 %v111
    %134 = vmatpush.bf16.msra.mxu0 %v110
    %135 = vmatmul.bf16.gmra.mxu0 %v116
    %v136 = vpop.f32.mrf.mxu0
    %v137 = vadd.f32 %v45, %v136
    %v138 = vpop.f32.mrf.mxu0
    %v139 = vadd.f32 %v50, %v138
    %140 = vmatmul.bf16.gmra.mxu0 %v119
    %v141 = vpop.f32.mrf.mxu0
    %v142 = vadd.f32 %v55, %v141
    %v143 = vpop.f32.mrf.mxu0
    %v144 = vadd.f32 %v60, %v143
    %145 = vmatmul.bf16.gmra.mxu0 %v122
    %v146 = vpop.f32.mrf.mxu0
    %v147 = vadd.f32 %v65, %v146
    %v148 = vpop.f32.mrf.mxu0
    %v149 = vadd.f32 %v70, %v148
    %150 = vmatmul.bf16.gmra.mxu0 %v125
    %v151 = vpop.f32.mrf.mxu0
    %v152 = vadd.f32 %v75, %v151
    %v153 = vpop.f32.mrf.mxu0
    %v154 = vadd.f32 %v80, %v153
    %155 = vdwg.mxu0
    %v156 = vmul.f32 %v137, 0.01
    %v157 = vmul.f32 %v139, 0.01
    %v158 = vmul.f32 %v142, 0.01
    %v159 = vmul.f32 %v144, 0.01
    %v160 = vmul.f32 %v147, 0.01
    %v161 = vmul.f32 %v149, 0.01
    %v162 = vmul.f32 %v152, 0.01
    %v163 = vmul.f32 %v154, 0.01
    %v164 = vmax.f32 %v137, %v156
    %v165 = vmax.f32 %v139, %v157
    %v166 = vmax.f32 %v142, %v158
    %v167 = vmax.f32 %v144, %v159
    %v168 = vmax.f32 %v147, %v160
    %v169 = vmax.f32 %v149, %v161
    %v170 = vmax.f32 %v152, %v162
    %v171 = vmax.f32 %v154, %v163
    %v172 = vld [vmem:[%s3] sm:$0x3]
    %v173 = vpack.c.bf16 %v165, %v164
    %v174 = vpack.c.bf16 %v167, %v166
    %v175 = vpack.c.bf16 %v169, %v168
    %v176 = vpack.c.bf16 %v171, %v170
    %v177 = vld [vmem:[%s4] sm:$0xf]
    %179 = vset.pattern.permute.xlu0 0
    %180 = vperm.xlu0 %179, %v177
    %v181 = vpop.permute.xlu0 %180
    %vm183 = vcmask 523264
    %v185 = vsel %vm183, %v172, 0
    %187 = vmatpush.bf16.msra.mxu0 0
    %188 = vmatpush.bf16.msra.mxu0 0
    %189 = vmatpush.bf16.msra.mxu0 0
    %190 = vmatpush.bf16.msra.mxu0 0
    %191 = vmatpush.bf16.msra.mxu0 %v176
    %192 = vmatpush.bf16.msra.mxu0 %v175
    %193 = vmatpush.bf16.msra.mxu0 %v174
    %194 = vmatpush.bf16.msra.mxu0 %v173
    %195 = vmatmul.bf16.gmra.mxu0 %v185
    %v196 = vpop.f32.mrf.mxu0
    %v197 = vadd.f32 %v181, %v196
    %v198 = vpop.f32.mrf.mxu0
    %199 = vdwg.mxu0
    %vm200 = vcmask 1043456
    %v201 = vsel %vm200, %v197, -inf
    %v202 = vrot.slane %v201, 4
    %v203 = vmax.f32 %v201, %v202
    %v204 = vrot.slane %v203, 2
    %v205 = vmax.f32 %v203, %v204
    %v206 = vrot.slane %v205, 1
    %v207 = vmax.f32 %v205, %v206
    %v208 = vsub.f32 %v197, %v207
    %v209 = vmul.f32 %v208, 1.442695
    %v210 = vpow.pop %v209
    %v211 = vsel %vm200, %v210, 0.0
    %v212 = vrot.slane %v211, 4
    %v213 = vadd.f32 %v211, %v212
    %v214 = vrot.slane %v213, 2
    %v215 = vadd.f32 %v213, %v214
    %v216 = vrot.slane %v215, 1
    %v217 = vadd.f32 %v215, %v216
    %v218 = vrcp.pop %v217
    %v219 = vmul.f32 %v210, %v218
    %220 = vst [vmem:[#allocation2] sm:$0xf] %v219
    // Predicated region
    $region22: #{tpu_custom_call.1} parent=1 // pred_check
      _
    $region23: #{tpu_custom_call.1} parent=1 // pred_check_branch
      %222 = sbr.rel (0) target = $region25
    $region24: #{tpu_custom_call.1} parent=1 // pred_region
      %224 = vsyncadd [#allocation3], 0
      %s226 = sshll.u32 [#allocation2], 4
      %s227 = int_to_ptr.vmem [resolvable:$true] %s226
      %s228 = sshll.u32 %s5, 4
      %s229 = int_to_ptr.hbm [resolvable:$true] %s228
      %231 = dma.vmem_to_hbm [thread:$0]  %s227, 64, %s229, [#allocation3]
    $region25: #{tpu_custom_call.1} parent=1 // pred_fallthru
      _
    // Predicated region
    $region26: #{tpu_custom_call.1} parent=1 // pred_check
      _
    $region27: #{tpu_custom_call.1} parent=1 // pred_check_branch
      %233 = sbr.rel (0) target = $region29
    $region28: #{tpu_custom_call.1} parent=1 // pred_region
      %235 = dma.done [#allocation3], 64
    $region29: #{tpu_custom_call.1} parent=1 // pred_fallthru
      _
    %236 = vsyncpa [#allocation3], 1

</llo_original>
